<compile_context>
chip_gen: v6e
topology: v6e:2x2x1
jax: 0.10.0
libtpu: 0.0.40
codegen_flags: <defaults>
</compile_context>

<pallas_src>
import jax
import jax.numpy as jnp
from jax.experimental import pallas as pl
from jax.experimental.pallas import tpu as pltpu


# ---------------------------------------------------------------------------
# Batched HBM->HBM copy kernel: n async DMAs, all started before any wait.
# ---------------------------------------------------------------------------
def _make_batched_copy_kernel(n):
    def kernel(*refs):
        in_refs = refs[:n]          # raw HBM refs (memory_space=pl.ANY)
        out_refs = refs[n:2 * n]    # raw HBM refs (memory_space=pl.ANY)
        sem = refs[2 * n]           # DMA semaphore array, one slot per tensor
        copies = [
            pltpu.make_async_copy(in_refs[i], out_refs[i], sem.at[i])
            for i in range(n)
        ]
        for cp in copies:           # issue all DMAs (overlap across entries)
            cp.start()
        for cp in copies:           # then drain
            cp.wait()
    return kernel


def _batched_hbm_copy(tensors):
    """One pallas_call copying every tensor HBM->HBM via async DMA."""
    n = len(tensors)
    out_shape = tuple(jax.ShapeDtypeStruct(t.shape, t.dtype) for t in tensors)
    total_bytes = sum(int(t.size) * jnp.dtype(t.dtype).itemsize for t in tensors)
    outs = pl.pallas_call(
        _make_batched_copy_kernel(n),
        out_shape=out_shape,
        in_specs=[pl.BlockSpec(memory_space=pl.ANY)] * n,
        out_specs=tuple(pl.BlockSpec(memory_space=pl.ANY) for _ in range(n)),
        scratch_shapes=[pltpu.SemaphoreType.DMA((n,))],
        cost_estimate=pl.CostEstimate(
            flops=0, transcendentals=0, bytes_accessed=2 * total_bytes),
    )(*tensors)
    return list(outs)


class ExpandTemporalDimDict:
    """JAX/Pallas port of ExpandTemporalDim_dict: (T*B, *rest) -> (T, B, *rest).

    Default path is a zero-cost metadata reshape (faithful translation of
    torch.Tensor.view).  `materialize=True` forces fresh buffers via a single
    batched HBM->HBM DMA Pallas kernel (one launch for the whole dict).
    """

    # TODO(synk): if per-DMA latency of very large tensors ever matters, split
    # each entry into 2-4 chunked DMAs inside the same kernel for deeper overlap.

    def __init__(self, T, materialize=False):
        self.T = int(T)
        self.materialize = materialize

    def __call__(self, x_dict):
        keys = list(x_dict.keys())
        y_shapes = {}
        for key in keys:
            x_seq = x_dict[key]
            if not isinstance(x_seq, jax.Array):
                raise ValueError(
                    f"Expected a jax.Array but got {type(x_seq)} for key '{key}'")
            n = x_seq.shape[0]
            if n % self.T != 0:
                raise ValueError(
                    f"Leading dim {n} of '{key}' is not divisible by T={self.T}")
            b = n // self.T
            y_shapes[key] = (self.T, b) + tuple(x_seq.shape[1:])

        if not self.materialize or not keys:
            # view semantics: metadata-only reshape, no kernel, no HBM traffic.
            return {k: x_dict[k].reshape(y_shapes[k]) for k in keys}

        # Materializing path: one pallas_call, one HBM->HBM DMA per entry.
        copied = _batched_hbm_copy([x_dict[k] for k in keys])
        return {k: c.reshape(y_shapes[k]) for k, c in zip(keys, copied)}


if __name__ == "__main__":
    T = 4
    B = 8
    C, H, W = 4, 16, 16
    hidden = 32

    key = jax.random.PRNGKey(0)
    k1, k2 = jax.random.split(key)
    x_dict = {
        "conv_feat": jax.random.normal(k1, (T * B, C, H, W), dtype=jnp.float32),
        "fc_feat":   jax.random.normal(k2, (T * B, hidden), dtype=jnp.float32),
    }

    # Default path: zero-cost reshape (the faithful port of torch.view).
    view_mod = ExpandTemporalDimDict(T)
    y_view = view_mod(x_dict)

    # Kernel path: materialized copy through one batched HBM->HBM DMA kernel.
    copy_mod = ExpandTemporalDimDict(T, materialize=True)
    y_copy = copy_mod(x_dict)
    for v in y_copy.values():
        jax.block_until_ready(v)

    ok = True
    for name, x_seq in x_dict.items():
        b = x_seq.shape[0] // T
        ref = x_seq.reshape((T, b) + tuple(x_seq.shape[1:]))
        ok &= y_view[name].shape == ref.shape
        ok &= y_copy[name].shape == ref.shape
        ok &= bool(jnp.array_equal(y_view[name], ref))
        ok &= bool(jnp.array_equal(y_copy[name], ref))
    assert ok, "mismatch vs reference reshape"
    print("KERNEL_OK")
</pallas_src>

<mosaic_0001>
module attributes {stable_mosaic.version = 11 : i64} {
  func.func @kernel(%arg0: memref<32x4x16x16xf32, #tpu.memory_space<any>>, %arg1: memref<32x32xf32, #tpu.memory_space<any>>, %arg2: memref<32x4x16x16xf32, #tpu.memory_space<any>>, %arg3: memref<32x32xf32, #tpu.memory_space<any>>, %arg4: memref<2x!tpu.dma_semaphore, #tpu.memory_space<semaphore_mem>>) attributes {dimension_semantics = [], scalar_prefetch = 0 : i64, scratch_operands = 1 : i64, tpu.core_type = #tpu.core_type<tc>} {
    %c0_i32 = arith.constant 0 : i32
    %0 = tpu.memref_slice %arg4[%c0_i32] : memref<2x!tpu.dma_semaphore, #tpu.memory_space<semaphore_mem>> -> memref<1x!tpu.dma_semaphore, #tpu.memory_space<semaphore_mem>>
    %1 = tpu.memref_squeeze %0 : memref<1x!tpu.dma_semaphore, #tpu.memory_space<semaphore_mem>> -> memref<!tpu.dma_semaphore, #tpu.memory_space<semaphore_mem>>
    tpu.enqueue_dma source(%arg0 : memref<32x4x16x16xf32, #tpu.memory_space<any>>) target(%arg2 : memref<32x4x16x16xf32, #tpu.memory_space<any>>) target_semaphore(%1 : memref<!tpu.dma_semaphore, #tpu.memory_space<semaphore_mem>>)
    %c1_i32 = arith.constant 1 : i32
    %2 = tpu.memref_slice %arg4[%c1_i32] : memref<2x!tpu.dma_semaphore, #tpu.memory_space<semaphore_mem>> -> memref<1x!tpu.dma_semaphore, #tpu.memory_space<semaphore_mem>>
    %3 = tpu.memref_squeeze %2 : memref<1x!tpu.dma_semaphore, #tpu.memory_space<semaphore_mem>> -> memref<!tpu.dma_semaphore, #tpu.memory_space<semaphore_mem>>
    tpu.enqueue_dma source(%arg1 : memref<32x32xf32, #tpu.memory_space<any>>) target(%arg3 : memref<32x32xf32, #tpu.memory_space<any>>) target_semaphore(%3 : memref<!tpu.dma_semaphore, #tpu.memory_space<semaphore_mem>>)
    %c0_i32_0 = arith.constant 0 : i32
    %4 = tpu.memref_slice %arg4[%c0_i32_0] : memref<2x!tpu.dma_semaphore, #tpu.memory_space<semaphore_mem>> -> memref<1x!tpu.dma_semaphore, #tpu.memory_space<semaphore_mem>>
    %5 = tpu.memref_squeeze %4 : memref<1x!tpu.dma_semaphore, #tpu.memory_space<semaphore_mem>> -> memref<!tpu.dma_semaphore, #tpu.memory_space<semaphore_mem>>
    tpu.wait_dma2 semaphore(%5 : memref<!tpu.dma_semaphore, #tpu.memory_space<semaphore_mem>>) src(%arg0 : memref<32x4x16x16xf32, #tpu.memory_space<any>>) dst(%arg2 : memref<32x4x16x16xf32, #tpu.memory_space<any>>)
    %c1_i32_1 = arith.constant 1 : i32
    %6 = tpu.memref_slice %arg4[%c1_i32_1] : memref<2x!tpu.dma_semaphore, #tpu.memory_space<semaphore_mem>> -> memref<1x!tpu.dma_semaphore, #tpu.memory_space<semaphore_mem>>
    %7 = tpu.memref_squeeze %6 : memref<1x!tpu.dma_semaphore, #tpu.memory_space<semaphore_mem>> -> memref<!tpu.dma_semaphore, #tpu.memory_space<semaphore_mem>>
    tpu.wait_dma2 semaphore(%7 : memref<!tpu.dma_semaphore, #tpu.memory_space<semaphore_mem>>) src(%arg1 : memref<32x32xf32, #tpu.memory_space<any>>) dst(%arg3 : memref<32x32xf32, #tpu.memory_space<any>>)
    return
  }
}

</mosaic_0001>

<llo_original>
// kernel: tpu_custom_call.1
$region0: #{tpu_custom_call.1}
  #allocation0 [shape = 'u32[]', space=smem, size = 0x4, offset = 0x4, fixed_abs, tag = 'smem constant byte address 0x4 - core index']
  #allocation1 [shape = 'u32[144,128]{1,0:T(1,128)}', space=vmem, size = 0x12000, scoped, tag = 'internal scratch']
  #allocation2 [shape = 's32[2]{0}', space=sflag, size = 0x8, scoped, tag = 'scratch operand']
  #allocation3 [shape = 's32[]', space=sflag, size = 0x4, offset = 0, fixed_abs, tag = 'sflag constant byte address 0x0 - dummy sync flag']
  #allocation4 [shape = 's32[]', space=sflag, size = 0x4, offset = 0, fixed_abs, tag = 'sflag constant byte address 0x0 - dummy sync flag']
  #allocation5 [shape = 's32[]', space=sflag, size = 0x4, offset = 0, fixed_abs, tag = 'sflag constant byte address 0x0 - dummy sync flag']
  #allocation6 [shape = 'u32[]', space=smem, size = 0x4, offset = 0x44, fixed_abs, tag = 'smem constant byte address 0x44 - assertion arg 0']
  #allocation7 [shape = 'u32[]', space=smem, size = 0x4, offset = 0x48, fixed_abs, tag = 'smem constant byte address 0x48 - assertion arg 1']
  %s0 = inlined_call_operand.vmem [shape: f32[32,4,16,16], index: 0, kind: input, shape index: {}]
  %s1 = inlined_call_operand.vmem [shape: f32[32,32], index: 1, kind: input, shape index: {}]
  %s2 = inlined_call_operand.vmem [shape: f32[32,4,16,16], index: 2, kind: output, shape index: {0}]
  %s3 = inlined_call_operand.hbm [shape: f32[32,32], index: 3, kind: output, shape index: {1}]
  %4 = xla_tuple %s2, %s3
  %s5 = sld [smem:[#allocation0]]
  $region40: #{tpu_custom_call.1} parent=0
    _
  %s7 = ssub.s32 1, %s5
  %s8 = scalar_select 0, %s7, %s5
  %p10 = scmp.lt.u32.totalorder 2048, 8
  %p11 = pneg %p10
  // Predicated region
  $region2: #{tpu_custom_call.1} parent=0 // pred_check
    _
  $region3: #{tpu_custom_call.1} parent=0 // pred_check_branch
    %13 = sbr.rel (%p10) target = $region5
  $region4: #{tpu_custom_call.1} parent=0 // pred_region
    %s29 = sand.u32 2048, 7
    %p30 = scmp.eq.s32.totalorder %s29, 0
    // Predicated region
    $region17: #{tpu_custom_call.1} parent=4 // pred_check
      %p31 = pneg %p30
    $region18: #{tpu_custom_call.1} parent=4 // pred_check_branch
      %33 = sbr.rel (%p31) target = $region20
    $region19: #{tpu_custom_call.1} parent=4 // pred_region
      loop: start=0, step=1, limit=1
      $region21: #{tpu_custom_call.1} parent=19 // loop_pre_header
        _
      $region22: #{tpu_custom_call.1} parent=19 // loop_header
        %s35 = sphi 0, %s39
        %p36 = scmp.ge.s32.totalorder %s35, 1
        %s40 = sphi %s0, %s0
        %s41 = sphi %s2, %s2
      $region23: #{tpu_custom_call.1} parent=19 // loop_header_branch
        %38 = sbr.rel (%p36) target = $region27
      $region24: #{tpu_custom_call.1} parent=19 // loop_body
        %v42 = vld [vmem:[%s40] sm:$0xff]
        %43 = vst [vmem:[%s41] sm:$0xff] %v42
        %v44 = vld [vmem:[%s40 + $0x8] sm:$0xff]
        %45 = vst [vmem:[%s41 + $0x8] sm:$0xff] %v44
        %v46 = vld [vmem:[%s40 + $0x10] sm:$0xff]
        %47 = vst [vmem:[%s41 + $0x10] sm:$0xff] %v46
        %v48 = vld [vmem:[%s40 + $0x18] sm:$0xff]
        %49 = vst [vmem:[%s41 + $0x18] sm:$0xff] %v48
        %v50 = vld [vmem:[%s40 + $0x20] sm:$0xff]
        %51 = vst [vmem:[%s41 + $0x20] sm:$0xff] %v50
        %v52 = vld [vmem:[%s40 + $0x28] sm:$0xff]
        %53 = vst [vmem:[%s41 + $0x28] sm:$0xff] %v52
        %v54 = vld [vmem:[%s40 + $0x30] sm:$0xff]
        %55 = vst [vmem:[%s41 + $0x30] sm:$0xff] %v54
        %v56 = vld [vmem:[%s40 + $0x38] sm:$0xff]
        %57 = vst [vmem:[%s41 + $0x38] sm:$0xff] %v56
        %v58 = vld [vmem:[%s40 + $0x40] sm:$0xff]
        %59 = vst [vmem:[%s41 + $0x40] sm:$0xff] %v58
        %v60 = vld [vmem:[%s40 + $0x48] sm:$0xff]
        %61 = vst [vmem:[%s41 + $0x48] sm:$0xff] %v60
        %v62 = vld [vmem:[%s40 + $0x50] sm:$0xff]
        %63 = vst [vmem:[%s41 + $0x50] sm:$0xff] %v62
        %v64 = vld [vmem:[%s40 + $0x58] sm:$0xff]
        %65 = vst [vmem:[%s41 + $0x58] sm:$0xff] %v64
        %v66 = vld [vmem:[%s40 + $0x60] sm:$0xff]
        %67 = vst [vmem:[%s41 + $0x60] sm:$0xff] %v66
        %v68 = vld [vmem:[%s40 + $0x68] sm:$0xff]
        %69 = vst [vmem:[%s41 + $0x68] sm:$0xff] %v68
        %v70 = vld [vmem:[%s40 + $0x70] sm:$0xff]
        %71 = vst [vmem:[%s41 + $0x70] sm:$0xff] %v70
        %v72 = vld [vmem:[%s40 + $0x78] sm:$0xff]
        %73 = vst [vmem:[%s41 + $0x78] sm:$0xff] %v72
        %v74 = vld [vmem:[%s40 + $0x80] sm:$0xff]
        %75 = vst [vmem:[%s41 + $0x80] sm:$0xff] %v74
        %v76 = vld [vmem:[%s40 + $0x88] sm:$0xff]
        %77 = vst [vmem:[%s41 + $0x88] sm:$0xff] %v76
        %v78 = vld [vmem:[%s40 + $0x90] sm:$0xff]
        %79 = vst [vmem:[%s41 + $0x90] sm:$0xff] %v78
        %v80 = vld [vmem:[%s40 + $0x98] sm:$0xff]
        %81 = vst [vmem:[%s41 + $0x98] sm:$0xff] %v80
        %v82 = vld [vmem:[%s40 + $0xa0] sm:$0xff]
        %83 = vst [vmem:[%s41 + $0xa0] sm:$0xff] %v82
        %v84 = vld [vmem:[%s40 + $0xa8] sm:$0xff]
        %85 = vst [vmem:[%s41 + $0xa8] sm:$0xff] %v84
        %v86 = vld [vmem:[%s40 + $0xb0] sm:$0xff]
        %87 = vst [vmem:[%s41 + $0xb0] sm:$0xff] %v86
        %v88 = vld [vmem:[%s40 + $0xb8] sm:$0xff]
        %89 = vst [vmem:[%s41 + $0xb8] sm:$0xff] %v88
        %v90 = vld [vmem:[%s40 + $0xc0] sm:$0xff]
        %91 = vst [vmem:[%s41 + $0xc0] sm:$0xff] %v90
        %v92 = vld [vmem:[%s40 + $0xc8] sm:$0xff]
        %93 = vst [vmem:[%s41 + $0xc8] sm:$0xff] %v92
        %v94 = vld [vmem:[%s40 + $0xd0] sm:$0xff]
        %95 = vst [vmem:[%s41 + $0xd0] sm:$0xff] %v94
        %v96 = vld [vmem:[%s40 + $0xd8] sm:$0xff]
        %97 = vst [vmem:[%s41 + $0xd8] sm:$0xff] %v96
        %v98 = vld [vmem:[%s40 + $0xe0] sm:$0xff]
        %99 = vst [vmem:[%s41 + $0xe0] sm:$0xff] %v98
        %v100 = vld [vmem:[%s40 + $0xe8] sm:$0xff]
        %101 = vst [vmem:[%s41 + $0xe8] sm:$0xff] %v100
        %v102 = vld [vmem:[%s40 + $0xf0] sm:$0xff]
        %103 = vst [vmem:[%s41 + $0xf0] sm:$0xff] %v102
        %v104 = vld [vmem:[%s40 + $0xf8] sm:$0xff]
        %105 = vst [vmem:[%s41 + $0xf8] sm:$0xff] %v104
        %v106 = vld [vmem:[%s40 + $0x100] sm:$0xff]
        %107 = vst [vmem:[%s41 + $0x100] sm:$0xff] %v106
        %v108 = vld [vmem:[%s40 + $0x108] sm:$0xff]
        %109 = vst [vmem:[%s41 + $0x108] sm:$0xff] %v108
        %v110 = vld [vmem:[%s40 + $0x110] sm:$0xff]
        %111 = vst [vmem:[%s41 + $0x110] sm:$0xff] %v110
        %v112 = vld [vmem:[%s40 + $0x118] sm:$0xff]
        %113 = vst [vmem:[%s41 + $0x118] sm:$0xff] %v112
        %v114 = vld [vmem:[%s40 + $0x120] sm:$0xff]
        %115 = vst [vmem:[%s41 + $0x120] sm:$0xff] %v114
        %v116 = vld [vmem:[%s40 + $0x128] sm:$0xff]
        %117 = vst [vmem:[%s41 + $0x128] sm:$0xff] %v116
        %v118 = vld [vmem:[%s40 + $0x130] sm:$0xff]
        %119 = vst [vmem:[%s41 + $0x130] sm:$0xff] %v118
        %v120 = vld [vmem:[%s40 + $0x138] sm:$0xff]
        %121 = vst [vmem:[%s41 + $0x138] sm:$0xff] %v120
        %v122 = vld [vmem:[%s40 + $0x140] sm:$0xff]
        %123 = vst [vmem:[%s41 + $0x140] sm:$0xff] %v122
        %v124 = vld [vmem:[%s40 + $0x148] sm:$0xff]
        %125 = vst [vmem:[%s41 + $0x148] sm:$0xff] %v124
        %v126 = vld [vmem:[%s40 + $0x150] sm:$0xff]
        %127 = vst [vmem:[%s41 + $0x150] sm:$0xff] %v126
        %v128 = vld [vmem:[%s40 + $0x158] sm:$0xff]
        %129 = vst [vmem:[%s41 + $0x158] sm:$0xff] %v128
        %v130 = vld [vmem:[%s40 + $0x160] sm:$0xff]
        %131 = vst [vmem:[%s41 + $0x160] sm:$0xff] %v130
        %v132 = vld [vmem:[%s40 + $0x168] sm:$0xff]
        %133 = vst [vmem:[%s41 + $0x168] sm:$0xff] %v132
        %v134 = vld [vmem:[%s40 + $0x170] sm:$0xff]
        %135 = vst [vmem:[%s41 + $0x170] sm:$0xff] %v134
        %v136 = vld [vmem:[%s40 + $0x178] sm:$0xff]
        %137 = vst [vmem:[%s41 + $0x178] sm:$0xff] %v136
        %v138 = vld [vmem:[%s40 + $0x180] sm:$0xff]
        %139 = vst [vmem:[%s41 + $0x180] sm:$0xff] %v138
        %v140 = vld [vmem:[%s40 + $0x188] sm:$0xff]
        %141 = vst [vmem:[%s41 + $0x188] sm:$0xff] %v140
        %v142 = vld [vmem:[%s40 + $0x190] sm:$0xff]
        %143 = vst [vmem:[%s41 + $0x190] sm:$0xff] %v142
        %v144 = vld [vmem:[%s40 + $0x198] sm:$0xff]
        %145 = vst [vmem:[%s41 + $0x198] sm:$0xff] %v144
        %v146 = vld [vmem:[%s40 + $0x1a0] sm:$0xff]
        %147 = vst [vmem:[%s41 + $0x1a0] sm:$0xff] %v146
        %v148 = vld [vmem:[%s40 + $0x1a8] sm:$0xff]
        %149 = vst [vmem:[%s41 + $0x1a8] sm:$0xff] %v148
        %v150 = vld [vmem:[%s40 + $0x1b0] sm:$0xff]
        %151 = vst [vmem:[%s41 + $0x1b0] sm:$0xff] %v150
        %v152 = vld [vmem:[%s40 + $0x1b8] sm:$0xff]
        %153 = vst [vmem:[%s41 + $0x1b8] sm:$0xff] %v152
        %v154 = vld [vmem:[%s40 + $0x1c0] sm:$0xff]
        %155 = vst [vmem:[%s41 + $0x1c0] sm:$0xff] %v154
        %v156 = vld [vmem:[%s40 + $0x1c8] sm:$0xff]
        %157 = vst [vmem:[%s41 + $0x1c8] sm:$0xff] %v156
        %v158 = vld [vmem:[%s40 + $0x1d0] sm:$0xff]
        %159 = vst [vmem:[%s41 + $0x1d0] sm:$0xff] %v158
        %v160 = vld [vmem:[%s40 + $0x1d8] sm:$0xff]
        %161 = vst [vmem:[%s41 + $0x1d8] sm:$0xff] %v160
        %v162 = vld [vmem:[%s40 + $0x1e0] sm:$0xff]
        %163 = vst [vmem:[%s41 + $0x1e0] sm:$0xff] %v162
        %v164 = vld [vmem:[%s40 + $0x1e8] sm:$0xff]
        %165 = vst [vmem:[%s41 + $0x1e8] sm:$0xff] %v164
        %v166 = vld [vmem:[%s40 + $0x1f0] sm:$0xff]
        %167 = vst [vmem:[%s41 + $0x1f0] sm:$0xff] %v166
        %v168 = vld [vmem:[%s40 + $0x1f8] sm:$0xff]
        %169 = vst [vmem:[%s41 + $0x1f8] sm:$0xff] %v168
        %v170 = vld [vmem:[%s40 + $0x200] sm:$0xff]
        %171 = vst [vmem:[%s41 + $0x200] sm:$0xff] %v170
        %v172 = vld [vmem:[%s40 + $0x208] sm:$0xff]
        %173 = vst [vmem:[%s41 + $0x208] sm:$0xff] %v172
        %v174 = vld [vmem:[%s40 + $0x210] sm:$0xff]
        %175 = vst [vmem:[%s41 + $0x210] sm:$0xff] %v174
        %v176 = vld [vmem:[%s40 + $0x218] sm:$0xff]
        %177 = vst [vmem:[%s41 + $0x218] sm:$0xff] %v176
        %v178 = vld [vmem:[%s40 + $0x220] sm:$0xff]
        %179 = vst [vmem:[%s41 + $0x220] sm:$0xff] %v178
        %v180 = vld [vmem:[%s40 + $0x228] sm:$0xff]
        %181 = vst [vmem:[%s41 + $0x228] sm:$0xff] %v180
        %v182 = vld [vmem:[%s40 + $0x230] sm:$0xff]
        %183 = vst [vmem:[%s41 + $0x230] sm:$0xff] %v182
        %v184 = vld [vmem:[%s40 + $0x238] sm:$0xff]
        %185 = vst [vmem:[%s41 + $0x238] sm:$0xff] %v184
        %v186 = vld [vmem:[%s40 + $0x240] sm:$0xff]
        %187 = vst [vmem:[%s41 + $0x240] sm:$0xff] %v186
        %v188 = vld [vmem:[%s40 + $0x248] sm:$0xff]
        %189 = vst [vmem:[%s41 + $0x248] sm:$0xff] %v188
        %v190 = vld [vmem:[%s40 + $0x250] sm:$0xff]
        %191 = vst [vmem:[%s41 + $0x250] sm:$0xff] %v190
        %v192 = vld [vmem:[%s40 + $0x258] sm:$0xff]
        %193 = vst [vmem:[%s41 + $0x258] sm:$0xff] %v192
        %v194 = vld [vmem:[%s40 + $0x260] sm:$0xff]
        %195 = vst [vmem:[%s41 + $0x260] sm:$0xff] %v194
        %v196 = vld [vmem:[%s40 + $0x268] sm:$0xff]
        %197 = vst [vmem:[%s41 + $0x268] sm:$0xff] %v196
        %v198 = vld [vmem:[%s40 + $0x270] sm:$0xff]
        %199 = vst [vmem:[%s41 + $0x270] sm:$0xff] %v198
        %v200 = vld [vmem:[%s40 + $0x278] sm:$0xff]
        %201 = vst [vmem:[%s41 + $0x278] sm:$0xff] %v200
        %v202 = vld [vmem:[%s40 + $0x280] sm:$0xff]
        %203 = vst [vmem:[%s41 + $0x280] sm:$0xff] %v202
        %v204 = vld [vmem:[%s40 + $0x288] sm:$0xff]
        %205 = vst [vmem:[%s41 + $0x288] sm:$0xff] %v204
        %v206 = vld [vmem:[%s40 + $0x290] sm:$0xff]
        %207 = vst [vmem:[%s41 + $0x290] sm:$0xff] %v206
        %v208 = vld [vmem:[%s40 + $0x298] sm:$0xff]
        %209 = vst [vmem:[%s41 + $0x298] sm:$0xff] %v208
        %v210 = vld [vmem:[%s40 + $0x2a0] sm:$0xff]
        %211 = vst [vmem:[%s41 + $0x2a0] sm:$0xff] %v210
        %v212 = vld [vmem:[%s40 + $0x2a8] sm:$0xff]
        %213 = vst [vmem:[%s41 + $0x2a8] sm:$0xff] %v212
        %v214 = vld [vmem:[%s40 + $0x2b0] sm:$0xff]
        %215 = vst [vmem:[%s41 + $0x2b0] sm:$0xff] %v214
        %v216 = vld [vmem:[%s40 + $0x2b8] sm:$0xff]
        %217 = vst [vmem:[%s41 + $0x2b8] sm:$0xff] %v216
        %v218 = vld [vmem:[%s40 + $0x2c0] sm:$0xff]
        %219 = vst [vmem:[%s41 + $0x2c0] sm:$0xff] %v218
        %v220 = vld [vmem:[%s40 + $0x2c8] sm:$0xff]
        %221 = vst [vmem:[%s41 + $0x2c8] sm:$0xff] %v220
        %v222 = vld [vmem:[%s40 + $0x2d0] sm:$0xff]
        %223 = vst [vmem:[%s41 + $0x2d0] sm:$0xff] %v222
        %v224 = vld [vmem:[%s40 + $0x2d8] sm:$0xff]
        %225 = vst [vmem:[%s41 + $0x2d8] sm:$0xff] %v224
        %v226 = vld [vmem:[%s40 + $0x2e0] sm:$0xff]
        %227 = vst [vmem:[%s41 + $0x2e0] sm:$0xff] %v226
        %v228 = vld [vmem:[%s40 + $0x2e8] sm:$0xff]
        %229 = vst [vmem:[%s41 + $0x2e8] sm:$0xff] %v228
        %v230 = vld [vmem:[%s40 + $0x2f0] sm:$0xff]
        %231 = vst [vmem:[%s41 + $0x2f0] sm:$0xff] %v230
        %v232 = vld [vmem:[%s40 + $0x2f8] sm:$0xff]
        %233 = vst [vmem:[%s41 + $0x2f8] sm:$0xff] %v232
        %v234 = vld [vmem:[%s40 + $0x300] sm:$0xff]
        %235 = vst [vmem:[%s41 + $0x300] sm:$0xff] %v234
        %v236 = vld [vmem:[%s40 + $0x308] sm:$0xff]
        %237 = vst [vmem:[%s41 + $0x308] sm:$0xff] %v236
        %v238 = vld [vmem:[%s40 + $0x310] sm:$0xff]
        %239 = vst [vmem:[%s41 + $0x310] sm:$0xff] %v238
        %v240 = vld [vmem:[%s40 + $0x318] sm:$0xff]
        %241 = vst [vmem:[%s41 + $0x318] sm:$0xff] %v240
        %v242 = vld [vmem:[%s40 + $0x320] sm:$0xff]
        %243 = vst [vmem:[%s41 + $0x320] sm:$0xff] %v242
        %v244 = vld [vmem:[%s40 + $0x328] sm:$0xff]
        %245 = vst [vmem:[%s41 + $0x328] sm:$0xff] %v244
        %v246 = vld [vmem:[%s40 + $0x330] sm:$0xff]
        %247 = vst [vmem:[%s41 + $0x330] sm:$0xff] %v246
        %v248 = vld [vmem:[%s40 + $0x338] sm:$0xff]
        %249 = vst [vmem:[%s41 + $0x338] sm:$0xff] %v248
        %v250 = vld [vmem:[%s40 + $0x340] sm:$0xff]
        %251 = vst [vmem:[%s41 + $0x340] sm:$0xff] %v250
        %v252 = vld [vmem:[%s40 + $0x348] sm:$0xff]
        %253 = vst [vmem:[%s41 + $0x348] sm:$0xff] %v252
        %v254 = vld [vmem:[%s40 + $0x350] sm:$0xff]
        %255 = vst [vmem:[%s41 + $0x350] sm:$0xff] %v254
        %v256 = vld [vmem:[%s40 + $0x358] sm:$0xff]
        %257 = vst [vmem:[%s41 + $0x358] sm:$0xff] %v256
        %v258 = vld [vmem:[%s40 + $0x360] sm:$0xff]
        %259 = vst [vmem:[%s41 + $0x360] sm:$0xff] %v258
        %v260 = vld [vmem:[%s40 + $0x368] sm:$0xff]
        %261 = vst [vmem:[%s41 + $0x368] sm:$0xff] %v260
        %v262 = vld [vmem:[%s40 + $0x370] sm:$0xff]
        %263 = vst [vmem:[%s41 + $0x370] sm:$0xff] %v262
        %v264 = vld [vmem:[%s40 + $0x378] sm:$0xff]
        %265 = vst [vmem:[%s41 + $0x378] sm:$0xff] %v264
        %v266 = vld [vmem:[%s40 + $0x380] sm:$0xff]
        %267 = vst [vmem:[%s41 + $0x380] sm:$0xff] %v266
        %v268 = vld [vmem:[%s40 + $0x388] sm:$0xff]
        %269 = vst [vmem:[%s41 + $0x388] sm:$0xff] %v268
        %v270 = vld [vmem:[%s40 + $0x390] sm:$0xff]
        %271 = vst [vmem:[%s41 + $0x390] sm:$0xff] %v270
        %v272 = vld [vmem:[%s40 + $0x398] sm:$0xff]
        %273 = vst [vmem:[%s41 + $0x398] sm:$0xff] %v272
        %v274 = vld [vmem:[%s40 + $0x3a0] sm:$0xff]
        %275 = vst [vmem:[%s41 + $0x3a0] sm:$0xff] %v274
        %v276 = vld [vmem:[%s40 + $0x3a8] sm:$0xff]
        %277 = vst [vmem:[%s41 + $0x3a8] sm:$0xff] %v276
        %v278 = vld [vmem:[%s40 + $0x3b0] sm:$0xff]
        %279 = vst [vmem:[%s41 + $0x3b0] sm:$0xff] %v278
        %v280 = vld [vmem:[%s40 + $0x3b8] sm:$0xff]
        %281 = vst [vmem:[%s41 + $0x3b8] sm:$0xff] %v280
        %v282 = vld [vmem:[%s40 + $0x3c0] sm:$0xff]
        %283 = vst [vmem:[%s41 + $0x3c0] sm:$0xff] %v282
        %v284 = vld [vmem:[%s40 + $0x3c8] sm:$0xff]
        %285 = vst [vmem:[%s41 + $0x3c8] sm:$0xff] %v284
        %v286 = vld [vmem:[%s40 + $0x3d0] sm:$0xff]
        %287 = vst [vmem:[%s41 + $0x3d0] sm:$0xff] %v286
        %v288 = vld [vmem:[%s40 + $0x3d8] sm:$0xff]
        %289 = vst [vmem:[%s41 + $0x3d8] sm:$0xff] %v288
        %v290 = vld [vmem:[%s40 + $0x3e0] sm:$0xff]
        %291 = vst [vmem:[%s41 + $0x3e0] sm:$0xff] %v290
        %v292 = vld [vmem:[%s40 + $0x3e8] sm:$0xff]
        %293 = vst [vmem:[%s41 + $0x3e8] sm:$0xff] %v292
        %v294 = vld [vmem:[%s40 + $0x3f0] sm:$0xff]
        %295 = vst [vmem:[%s41 + $0x3f0] sm:$0xff] %v294
        %v296 = vld [vmem:[%s40 + $0x3f8] sm:$0xff]
        %297 = vst [vmem:[%s41 + $0x3f8] sm:$0xff] %v296
        %v298 = vld [vmem:[%s40 + $0x400] sm:$0xff]
        %299 = vst [vmem:[%s41 + $0x400] sm:$0xff] %v298
        %v300 = vld [vmem:[%s40 + $0x408] sm:$0xff]
        %301 = vst [vmem:[%s41 + $0x408] sm:$0xff] %v300
        %v302 = vld [vmem:[%s40 + $0x410] sm:$0xff]
        %303 = vst [vmem:[%s41 + $0x410] sm:$0xff] %v302
        %v304 = vld [vmem:[%s40 + $0x418] sm:$0xff]
        %305 = vst [vmem:[%s41 + $0x418] sm:$0xff] %v304
        %v306 = vld [vmem:[%s40 + $0x420] sm:$0xff]
        %307 = vst [vmem:[%s41 + $0x420] sm:$0xff] %v306
        %v308 = vld [vmem:[%s40 + $0x428] sm:$0xff]
        %309 = vst [vmem:[%s41 + $0x428] sm:$0xff] %v308
        %v310 = vld [vmem:[%s40 + $0x430] sm:$0xff]
        %311 = vst [vmem:[%s41 + $0x430] sm:$0xff] %v310
        %v312 = vld [vmem:[%s40 + $0x438] sm:$0xff]
        %313 = vst [vmem:[%s41 + $0x438] sm:$0xff] %v312
        %v314 = vld [vmem:[%s40 + $0x440] sm:$0xff]
        %315 = vst [vmem:[%s41 + $0x440] sm:$0xff] %v314
        %v316 = vld [vmem:[%s40 + $0x448] sm:$0xff]
        %317 = vst [vmem:[%s41 + $0x448] sm:$0xff] %v316
        %v318 = vld [vmem:[%s40 + $0x450] sm:$0xff]
        %319 = vst [vmem:[%s41 + $0x450] sm:$0xff] %v318
        %v320 = vld [vmem:[%s40 + $0x458] sm:$0xff]
        %321 = vst [vmem:[%s41 + $0x458] sm:$0xff] %v320
        %v322 = vld [vmem:[%s40 + $0x460] sm:$0xff]
        %323 = vst [vmem:[%s41 + $0x460] sm:$0xff] %v322
        %v324 = vld [vmem:[%s40 + $0x468] sm:$0xff]
        %325 = vst [vmem:[%s41 + $0x468] sm:$0xff] %v324
        %v326 = vld [vmem:[%s40 + $0x470] sm:$0xff]
        %327 = vst [vmem:[%s41 + $0x470] sm:$0xff] %v326
        %v328 = vld [vmem:[%s40 + $0x478] sm:$0xff]
        %329 = vst [vmem:[%s41 + $0x478] sm:$0xff] %v328
        %v330 = vld [vmem:[%s40 + $0x480] sm:$0xff]
        %331 = vst [vmem:[%s41 + $0x480] sm:$0xff] %v330
        %v332 = vld [vmem:[%s40 + $0x488] sm:$0xff]
        %333 = vst [vmem:[%s41 + $0x488] sm:$0xff] %v332
        %v334 = vld [vmem:[%s40 + $0x490] sm:$0xff]
        %335 = vst [vmem:[%s41 + $0x490] sm:$0xff] %v334
        %v336 = vld [vmem:[%s40 + $0x498] sm:$0xff]
        %337 = vst [vmem:[%s41 + $0x498] sm:$0xff] %v336
        %v338 = vld [vmem:[%s40 + $0x4a0] sm:$0xff]
        %339 = vst [vmem:[%s41 + $0x4a0] sm:$0xff] %v338
        %v340 = vld [vmem:[%s40 + $0x4a8] sm:$0xff]
        %341 = vst [vmem:[%s41 + $0x4a8] sm:$0xff] %v340
        %v342 = vld [vmem:[%s40 + $0x4b0] sm:$0xff]
        %343 = vst [vmem:[%s41 + $0x4b0] sm:$0xff] %v342
        %v344 = vld [vmem:[%s40 + $0x4b8] sm:$0xff]
        %345 = vst [vmem:[%s41 + $0x4b8] sm:$0xff] %v344
        %v346 = vld [vmem:[%s40 + $0x4c0] sm:$0xff]
        %347 = vst [vmem:[%s41 + $0x4c0] sm:$0xff] %v346
        %v348 = vld [vmem:[%s40 + $0x4c8] sm:$0xff]
        %349 = vst [vmem:[%s41 + $0x4c8] sm:$0xff] %v348
        %v350 = vld [vmem:[%s40 + $0x4d0] sm:$0xff]
        %351 = vst [vmem:[%s41 + $0x4d0] sm:$0xff] %v350
        %v352 = vld [vmem:[%s40 + $0x4d8] sm:$0xff]
        %353 = vst [vmem:[%s41 + $0x4d8] sm:$0xff] %v352
        %v354 = vld [vmem:[%s40 + $0x4e0] sm:$0xff]
        %355 = vst [vmem:[%s41 + $0x4e0] sm:$0xff] %v354
        %v356 = vld [vmem:[%s40 + $0x4e8] sm:$0xff]
        %357 = vst [vmem:[%s41 + $0x4e8] sm:$0xff] %v356
        %v358 = vld [vmem:[%s40 + $0x4f0] sm:$0xff]
        %359 = vst [vmem:[%s41 + $0x4f0] sm:$0xff] %v358
        %v360 = vld [vmem:[%s40 + $0x4f8] sm:$0xff]
        %361 = vst [vmem:[%s41 + $0x4f8] sm:$0xff] %v360
        %v362 = vld [vmem:[%s40 + $0x500] sm:$0xff]
        %363 = vst [vmem:[%s41 + $0x500] sm:$0xff] %v362
        %v364 = vld [vmem:[%s40 + $0x508] sm:$0xff]
        %365 = vst [vmem:[%s41 + $0x508] sm:$0xff] %v364
        %v366 = vld [vmem:[%s40 + $0x510] sm:$0xff]
        %367 = vst [vmem:[%s41 + $0x510] sm:$0xff] %v366
        %v368 = vld [vmem:[%s40 + $0x518] sm:$0xff]
        %369 = vst [vmem:[%s41 + $0x518] sm:$0xff] %v368
        %v370 = vld [vmem:[%s40 + $0x520] sm:$0xff]
        %371 = vst [vmem:[%s41 + $0x520] sm:$0xff] %v370
        %v372 = vld [vmem:[%s40 + $0x528] sm:$0xff]
        %373 = vst [vmem:[%s41 + $0x528] sm:$0xff] %v372
        %v374 = vld [vmem:[%s40 + $0x530] sm:$0xff]
        %375 = vst [vmem:[%s41 + $0x530] sm:$0xff] %v374
        %v376 = vld [vmem:[%s40 + $0x538] sm:$0xff]
        %377 = vst [vmem:[%s41 + $0x538] sm:$0xff] %v376
        %v378 = vld [vmem:[%s40 + $0x540] sm:$0xff]
        %379 = vst [vmem:[%s41 + $0x540] sm:$0xff] %v378
        %v380 = vld [vmem:[%s40 + $0x548] sm:$0xff]
        %381 = vst [vmem:[%s41 + $0x548] sm:$0xff] %v380
        %v382 = vld [vmem:[%s40 + $0x550] sm:$0xff]
        %383 = vst [vmem:[%s41 + $0x550] sm:$0xff] %v382
        %v384 = vld [vmem:[%s40 + $0x558] sm:$0xff]
        %385 = vst [vmem:[%s41 + $0x558] sm:$0xff] %v384
        %v386 = vld [vmem:[%s40 + $0x560] sm:$0xff]
        %387 = vst [vmem:[%s41 + $0x560] sm:$0xff] %v386
        %v388 = vld [vmem:[%s40 + $0x568] sm:$0xff]
        %389 = vst [vmem:[%s41 + $0x568] sm:$0xff] %v388
        %v390 = vld [vmem:[%s40 + $0x570] sm:$0xff]
        %391 = vst [vmem:[%s41 + $0x570] sm:$0xff] %v390
        %v392 = vld [vmem:[%s40 + $0x578] sm:$0xff]
        %393 = vst [vmem:[%s41 + $0x578] sm:$0xff] %v392
        %v394 = vld [vmem:[%s40 + $0x580] sm:$0xff]
        %395 = vst [vmem:[%s41 + $0x580] sm:$0xff] %v394
        %v396 = vld [vmem:[%s40 + $0x588] sm:$0xff]
        %397 = vst [vmem:[%s41 + $0x588] sm:$0xff] %v396
        %v398 = vld [vmem:[%s40 + $0x590] sm:$0xff]
        %399 = vst [vmem:[%s41 + $0x590] sm:$0xff] %v398
        %v400 = vld [vmem:[%s40 + $0x598] sm:$0xff]
        %401 = vst [vmem:[%s41 + $0x598] sm:$0xff] %v400
        %v402 = vld [vmem:[%s40 + $0x5a0] sm:$0xff]
        %403 = vst [vmem:[%s41 + $0x5a0] sm:$0xff] %v402
        %v404 = vld [vmem:[%s40 + $0x5a8] sm:$0xff]
        %405 = vst [vmem:[%s41 + $0x5a8] sm:$0xff] %v404
        %v406 = vld [vmem:[%s40 + $0x5b0] sm:$0xff]
        %407 = vst [vmem:[%s41 + $0x5b0] sm:$0xff] %v406
        %v408 = vld [vmem:[%s40 + $0x5b8] sm:$0xff]
        %409 = vst [vmem:[%s41 + $0x5b8] sm:$0xff] %v408
        %v410 = vld [vmem:[%s40 + $0x5c0] sm:$0xff]
        %411 = vst [vmem:[%s41 + $0x5c0] sm:$0xff] %v410
        %v412 = vld [vmem:[%s40 + $0x5c8] sm:$0xff]
        %413 = vst [vmem:[%s41 + $0x5c8] sm:$0xff] %v412
        %v414 = vld [vmem:[%s40 + $0x5d0] sm:$0xff]
        %415 = vst [vmem:[%s41 + $0x5d0] sm:$0xff] %v414
        %v416 = vld [vmem:[%s40 + $0x5d8] sm:$0xff]
        %417 = vst [vmem:[%s41 + $0x5d8] sm:$0xff] %v416
        %v418 = vld [vmem:[%s40 + $0x5e0] sm:$0xff]
        %419 = vst [vmem:[%s41 + $0x5e0] sm:$0xff] %v418
        %v420 = vld [vmem:[%s40 + $0x5e8] sm:$0xff]
        %421 = vst [vmem:[%s41 + $0x5e8] sm:$0xff] %v420
        %v422 = vld [vmem:[%s40 + $0x5f0] sm:$0xff]
        %423 = vst [vmem:[%s41 + $0x5f0] sm:$0xff] %v422
        %v424 = vld [vmem:[%s40 + $0x5f8] sm:$0xff]
        %425 = vst [vmem:[%s41 + $0x5f8] sm:$0xff] %v424
        %v426 = vld [vmem:[%s40 + $0x600] sm:$0xff]
        %427 = vst [vmem:[%s41 + $0x600] sm:$0xff] %v426
        %v428 = vld [vmem:[%s40 + $0x608] sm:$0xff]
        %429 = vst [vmem:[%s41 + $0x608] sm:$0xff] %v428
        %v430 = vld [vmem:[%s40 + $0x610] sm:$0xff]
        %431 = vst [vmem:[%s41 + $0x610] sm:$0xff] %v430
        %v432 = vld [vmem:[%s40 + $0x618] sm:$0xff]
        %433 = vst [vmem:[%s41 + $0x618] sm:$0xff] %v432
        %v434 = vld [vmem:[%s40 + $0x620] sm:$0xff]
        %435 = vst [vmem:[%s41 + $0x620] sm:$0xff] %v434
        %v436 = vld [vmem:[%s40 + $0x628] sm:$0xff]
        %437 = vst [vmem:[%s41 + $0x628] sm:$0xff] %v436
        %v438 = vld [vmem:[%s40 + $0x630] sm:$0xff]
        %439 = vst [vmem:[%s41 + $0x630] sm:$0xff] %v438
        %v440 = vld [vmem:[%s40 + $0x638] sm:$0xff]
        %441 = vst [vmem:[%s41 + $0x638] sm:$0xff] %v440
        %v442 = vld [vmem:[%s40 + $0x640] sm:$0xff]
        %443 = vst [vmem:[%s41 + $0x640] sm:$0xff] %v442
        %v444 = vld [vmem:[%s40 + $0x648] sm:$0xff]
        %445 = vst [vmem:[%s41 + $0x648] sm:$0xff] %v444
        %v446 = vld [vmem:[%s40 + $0x650] sm:$0xff]
        %447 = vst [vmem:[%s41 + $0x650] sm:$0xff] %v446
        %v448 = vld [vmem:[%s40 + $0x658] sm:$0xff]
        %449 = vst [vmem:[%s41 + $0x658] sm:$0xff] %v448
        %v450 = vld [vmem:[%s40 + $0x660] sm:$0xff]
        %451 = vst [vmem:[%s41 + $0x660] sm:$0xff] %v450
        %v452 = vld [vmem:[%s40 + $0x668] sm:$0xff]
        %453 = vst [vmem:[%s41 + $0x668] sm:$0xff] %v452
        %v454 = vld [vmem:[%s40 + $0x670] sm:$0xff]
        %455 = vst [vmem:[%s41 + $0x670] sm:$0xff] %v454
        %v456 = vld [vmem:[%s40 + $0x678] sm:$0xff]
        %457 = vst [vmem:[%s41 + $0x678] sm:$0xff] %v456
        %v458 = vld [vmem:[%s40 + $0x680] sm:$0xff]
        %459 = vst [vmem:[%s41 + $0x680] sm:$0xff] %v458
        %v460 = vld [vmem:[%s40 + $0x688] sm:$0xff]
        %461 = vst [vmem:[%s41 + $0x688] sm:$0xff] %v460
        %v462 = vld [vmem:[%s40 + $0x690] sm:$0xff]
        %463 = vst [vmem:[%s41 + $0x690] sm:$0xff] %v462
        %v464 = vld [vmem:[%s40 + $0x698] sm:$0xff]
        %465 = vst [vmem:[%s41 + $0x698] sm:$0xff] %v464
        %v466 = vld [vmem:[%s40 + $0x6a0] sm:$0xff]
        %467 = vst [vmem:[%s41 + $0x6a0] sm:$0xff] %v466
        %v468 = vld [vmem:[%s40 + $0x6a8] sm:$0xff]
        %469 = vst [vmem:[%s41 + $0x6a8] sm:$0xff] %v468
        %v470 = vld [vmem:[%s40 + $0x6b0] sm:$0xff]
        %471 = vst [vmem:[%s41 + $0x6b0] sm:$0xff] %v470
        %v472 = vld [vmem:[%s40 + $0x6b8] sm:$0xff]
        %473 = vst [vmem:[%s41 + $0x6b8] sm:$0xff] %v472
        %v474 = vld [vmem:[%s40 + $0x6c0] sm:$0xff]
        %475 = vst [vmem:[%s41 + $0x6c0] sm:$0xff] %v474
        %v476 = vld [vmem:[%s40 + $0x6c8] sm:$0xff]
        %477 = vst [vmem:[%s41 + $0x6c8] sm:$0xff] %v476
        %v478 = vld [vmem:[%s40 + $0x6d0] sm:$0xff]
        %479 = vst [vmem:[%s41 + $0x6d0] sm:$0xff] %v478
        %v480 = vld [vmem:[%s40 + $0x6d8] sm:$0xff]
        %481 = vst [vmem:[%s41 + $0x6d8] sm:$0xff] %v480
        %v482 = vld [vmem:[%s40 + $0x6e0] sm:$0xff]
        %483 = vst [vmem:[%s41 + $0x6e0] sm:$0xff] %v482
        %v484 = vld [vmem:[%s40 + $0x6e8] sm:$0xff]
        %485 = vst [vmem:[%s41 + $0x6e8] sm:$0xff] %v484
        %v486 = vld [vmem:[%s40 + $0x6f0] sm:$0xff]
        %487 = vst [vmem:[%s41 + $0x6f0] sm:$0xff] %v486
        %v488 = vld [vmem:[%s40 + $0x6f8] sm:$0xff]
        %489 = vst [vmem:[%s41 + $0x6f8] sm:$0xff] %v488
        %v490 = vld [vmem:[%s40 + $0x700] sm:$0xff]
        %491 = vst [vmem:[%s41 + $0x700] sm:$0xff] %v490
        %v492 = vld [vmem:[%s40 + $0x708] sm:$0xff]
        %493 = vst [vmem:[%s41 + $0x708] sm:$0xff] %v492
        %v494 = vld [vmem:[%s40 + $0x710] sm:$0xff]
        %495 = vst [vmem:[%s41 + $0x710] sm:$0xff] %v494
        %v496 = vld [vmem:[%s40 + $0x718] sm:$0xff]
        %497 = vst [vmem:[%s41 + $0x718] sm:$0xff] %v496
        %v498 = vld [vmem:[%s40 + $0x720] sm:$0xff]
        %499 = vst [vmem:[%s41 + $0x720] sm:$0xff] %v498
        %v500 = vld [vmem:[%s40 + $0x728] sm:$0xff]
        %501 = vst [vmem:[%s41 + $0x728] sm:$0xff] %v500
        %v502 = vld [vmem:[%s40 + $0x730] sm:$0xff]
        %503 = vst [vmem:[%s41 + $0x730] sm:$0xff] %v502
        %v504 = vld [vmem:[%s40 + $0x738] sm:$0xff]
        %505 = vst [vmem:[%s41 + $0x738] sm:$0xff] %v504
        %v506 = vld [vmem:[%s40 + $0x740] sm:$0xff]
        %507 = vst [vmem:[%s41 + $0x740] sm:$0xff] %v506
        %v508 = vld [vmem:[%s40 + $0x748] sm:$0xff]
        %509 = vst [vmem:[%s41 + $0x748] sm:$0xff] %v508
        %v510 = vld [vmem:[%s40 + $0x750] sm:$0xff]
        %511 = vst [vmem:[%s41 + $0x750] sm:$0xff] %v510
        %v512 = vld [vmem:[%s40 + $0x758] sm:$0xff]
        %513 = vst [vmem:[%s41 + $0x758] sm:$0xff] %v512
        %v514 = vld [vmem:[%s40 + $0x760] sm:$0xff]
        %515 = vst [vmem:[%s41 + $0x760] sm:$0xff] %v514
        %v516 = vld [vmem:[%s40 + $0x768] sm:$0xff]
        %517 = vst [vmem:[%s41 + $0x768] sm:$0xff] %v516
        %v518 = vld [vmem:[%s40 + $0x770] sm:$0xff]
        %519 = vst [vmem:[%s41 + $0x770] sm:$0xff] %v518
        %v520 = vld [vmem:[%s40 + $0x778] sm:$0xff]
        %521 = vst [vmem:[%s41 + $0x778] sm:$0xff] %v520
        %v522 = vld [vmem:[%s40 + $0x780] sm:$0xff]
        %523 = vst [vmem:[%s41 + $0x780] sm:$0xff] %v522
        %v524 = vld [vmem:[%s40 + $0x788] sm:$0xff]
        %525 = vst [vmem:[%s41 + $0x788] sm:$0xff] %v524
        %v526 = vld [vmem:[%s40 + $0x790] sm:$0xff]
        %527 = vst [vmem:[%s41 + $0x790] sm:$0xff] %v526
        %v528 = vld [vmem:[%s40 + $0x798] sm:$0xff]
        %529 = vst [vmem:[%s41 + $0x798] sm:$0xff] %v528
        %v530 = vld [vmem:[%s40 + $0x7a0] sm:$0xff]
        %531 = vst [vmem:[%s41 + $0x7a0] sm:$0xff] %v530
        %v532 = vld [vmem:[%s40 + $0x7a8] sm:$0xff]
        %533 = vst [vmem:[%s41 + $0x7a8] sm:$0xff] %v532
        %v534 = vld [vmem:[%s40 + $0x7b0] sm:$0xff]
        %535 = vst [vmem:[%s41 + $0x7b0] sm:$0xff] %v534
        %v536 = vld [vmem:[%s40 + $0x7b8] sm:$0xff]
        %537 = vst [vmem:[%s41 + $0x7b8] sm:$0xff] %v536
        %v538 = vld [vmem:[%s40 + $0x7c0] sm:$0xff]
        %539 = vst [vmem:[%s41 + $0x7c0] sm:$0xff] %v538
        %v540 = vld [vmem:[%s40 + $0x7c8] sm:$0xff]
        %541 = vst [vmem:[%s41 + $0x7c8] sm:$0xff] %v540
        %v542 = vld [vmem:[%s40 + $0x7d0] sm:$0xff]
        %543 = vst [vmem:[%s41 + $0x7d0] sm:$0xff] %v542
        %v544 = vld [vmem:[%s40 + $0x7d8] sm:$0xff]
        %545 = vst [vmem:[%s41 + $0x7d8] sm:$0xff] %v544
        %v546 = vld [vmem:[%s40 + $0x7e0] sm:$0xff]
        %547 = vst [vmem:[%s41 + $0x7e0] sm:$0xff] %v546
        %v548 = vld [vmem:[%s40 + $0x7e8] sm:$0xff]
        %549 = vst [vmem:[%s41 + $0x7e8] sm:$0xff] %v548
        %v550 = vld [vmem:[%s40 + $0x7f0] sm:$0xff]
        %551 = vst [vmem:[%s41 + $0x7f0] sm:$0xff] %v550
        %v552 = vld [vmem:[%s40 + $0x7f8] sm:$0xff]
        %553 = vst [vmem:[%s41 + $0x7f8] sm:$0xff] %v552
      $region25: #{tpu_custom_call.1} parent=19 // loop_footer
        %s39 = sadd.s32 1, %s35
      $region26: #{tpu_custom_call.1} parent=19 // loop_footer_branch
        %34 = sbr.rel target = $region22
      $region27: #{tpu_custom_call.1} parent=19 // loop_exit
        _
    $region20: #{tpu_custom_call.1} parent=4 // pred_fallthru
      _
    %p554 = pneg %p30
    // Predicated region
    $region28: #{tpu_custom_call.1} parent=4 // pred_check
      _
    $region29: #{tpu_custom_call.1} parent=4 // pred_check_branch
      %556 = sbr.rel (%p30) target = $region31
    $region30: #{tpu_custom_call.1} parent=4 // pred_region
      %s557 = sand.u32 2048, 7
    $region31: #{tpu_custom_call.1} parent=4 // pred_fallthru
      _
  $region5: #{tpu_custom_call.1} parent=0 // pred_fallthru
    _
  // Predicated region
  $region6: #{tpu_custom_call.1} parent=0 // pred_check
    %p14 = pneg %p10
  $region7: #{tpu_custom_call.1} parent=0 // pred_check_branch
    %16 = sbr.rel (%p14) target = $region9
  $region8: #{tpu_custom_call.1} parent=0 // pred_region
    %s17 = sshll.u32 1, 2048
    %s18 = ssub.s32 %s17, 1
    loop: start=0, step=1, limit=1
    $region10: #{tpu_custom_call.1} parent=8 // loop_pre_header
      _
    $region11: #{tpu_custom_call.1} parent=8 // loop_header
      %s20 = sphi 0, %s24
      %p21 = scmp.ge.s32.totalorder %s20, 1
      %s25 = sphi %s0, %s0
      %s26 = sphi %s2, %s2
    $region12: #{tpu_custom_call.1} parent=8 // loop_header_branch
      %23 = sbr.rel (%p21) target = $region16
    $region13: #{tpu_custom_call.1} parent=8 // loop_body
      %v27 = vld [vmem:[%s25] sm:%s18]
      %28 = vst [vmem:[%s26] sm:%s18] %v27
    $region14: #{tpu_custom_call.1} parent=8 // loop_footer
      %s24 = sadd.s32 1, %s20
    $region15: #{tpu_custom_call.1} parent=8 // loop_footer_branch
      %19 = sbr.rel target = $region11
    $region16: #{tpu_custom_call.1} parent=8 // loop_exit
      _
  $region9: #{tpu_custom_call.1} parent=0 // pred_fallthru
    _
  // Predicated region
  $region32: #{tpu_custom_call.1} parent=0 // pred_check
    _
  $region33: #{tpu_custom_call.1} parent=0 // pred_check_branch
    %560 = sbr.rel (0) target = $region35
  $region34: #{tpu_custom_call.1} parent=0 // pred_region
    %561 = vsyncadd [#allocation2], 32768
  $region35: #{tpu_custom_call.1} parent=0 // pred_fallthru
    _
  %s562 = scalar_lea.sflag [#allocation2], 1
  // Predicated region
  $region36: #{tpu_custom_call.1} parent=0 // pred_check
    _
  $region37: #{tpu_custom_call.1} parent=0 // pred_check_branch
    %564 = sbr.rel target = $region39
  $region38: #{tpu_custom_call.1} parent=0 // pred_region
    %565 = sst [smem:[#allocation6]] [#allocation5]
    %566 = sst [smem:[#allocation7]] [#allocation4]
  $region39: #{tpu_custom_call.1} parent=0 // pred_fallthru
    _
  %568 = shalt.err (0)
  %s570 = sshll.u32 %s1, 4
  %s571 = int_to_ptr.vmem [resolvable:$true] %s570
  %573 = dma.vmem_to_hbm [thread:$0]  %s571, 512, %s3, %s562
  %s574 = smul.u32 32, 4
  %s575 = smul.u32 %s574, 16
  %s576 = smul.u32 %s575, 1
  %s577 = sshll.u32 %s576, 4
  %578 = dma.done [#allocation2], %s577
  %s579 = smul.u32 32, 1
  %s580 = sshll.u32 %s579, 4
  %581 = dma.done %s562, %s580
  %582 = vsyncmov [#allocation2]
  %s583 = vpop.sfrf %582
  %p584 = scmp.eq.s32.totalorder %s583, 0
  %p585 = pneg %p584
  %587 = shalt.err (%p585)
  %s588 = scalar_lea.sflag [#allocation2], 1
  %589 = vsyncmov %s588
  %s590 = vpop.sfrf %589
  %p591 = scmp.eq.s32.totalorder %s590, 0
  %p592 = pneg %p591
  %594 = shalt.err (%p592)

</llo_original>
